<compile_context>
chip_gen: v5e
topology: v5e:2x2
jax: 0.10.0
libtpu: 0.0.40
codegen_flags: <defaults>
</compile_context>

<pallas_src>
import functools

import jax
import jax.numpy as jnp
import numpy as np
from jax.experimental import pallas as pl
from jax.experimental.pallas import tpu as pltpu

N_COMPONENTS = 2
_LANES = 128
_MAX_TILE_ROWS = 8192  # (8192,128) f32 = 4 MiB/buffer; <=16 MiB double-buffered in+out


def _mog_kernel(means_ref, scale_ref, const_ref, x_ref, o_ref, *, n_components):
    """Per-tile MoG log-density.

    means_ref, scale_ref, const_ref : SMEM (K,) f32
    x_ref                           : VMEM (tile_rows, 128) input dtype
    o_ref                           : VMEM (tile_rows, 128) f32
    """
    x = x_ref[...].astype(jnp.float32)

    if n_components == 2:
        # logsumexp2: max(a,b) + log(1 + exp(-|a-b|)) -> 1 exp + 1 log / element.
        d0 = x - means_ref[0]
        a = d0 * d0 * scale_ref[0] + const_ref[0]
        d1 = x - means_ref[1]
        b = d1 * d1 * scale_ref[1] + const_ref[1]
        m = jnp.maximum(a, b)
        o_ref[...] = (m + jnp.log(1.0 + jnp.exp(-jnp.abs(a - b)))).astype(o_ref.dtype)
    else:
        # General small static K: compute all lm_k, single max, K exps, one log.
        lms = []
        for k in range(n_components):
            d = x - means_ref[k]
            lms.append(d * d * scale_ref[k] + const_ref[k])
        m = lms[0]
        for k in range(1, n_components):
            m = jnp.maximum(m, lms[k])
        s = jnp.exp(lms[0] - m)
        for k in range(1, n_components):
            s = s + jnp.exp(lms[k] - m)
        o_ref[...] = (m + jnp.log(s)).astype(o_ref.dtype)


def _num_tensorcores():
    """Best-effort TensorCore-per-device count (v7x=2, v5e/v6e=1)."""
    try:
        info = pltpu.get_tpu_info()
        for attr in ("num_cores", "core_count", "num_tensorcores",
                     "tensorcores_per_chip", "cores_per_chip"):
            v = getattr(info, attr, None)
            if v:
                return int(v)
    except Exception:
        pass
    return 1


def _choose_tiling(rows, min_rows, num_cores):
    """Pick (tile_rows, grid_steps).

    Prefers the biggest tiles (fewest grid steps) since per-step overhead is the
    dominant tax for an HBM-streaming kernel; on multi-TC chips the step count
    is kept a multiple of the core count so work is balanced across cores.
    """
    steps = pl.cdiv(rows, _MAX_TILE_ROWS)
    if num_cores >= 2:
        if steps == 1 and rows >= 2 * min_rows:
            steps = num_cores
        elif steps % num_cores:
            steps += num_cores - (steps % num_cores)
    tile_rows = pl.cdiv(rows, steps)
    tile_rows = ((tile_rows + min_rows - 1) // min_rows) * min_rows
    tile_rows = min(tile_rows, _MAX_TILE_ROWS)
    steps = pl.cdiv(rows, tile_rows)
    return tile_rows, steps


def mog_log_prob(x, weights, means, log_stds):
    """JAX wrapper reproducing MoG.forward(x) (log prob density at x).

    Output is float32 (matching PyTorch promotion against the f32 parameters).
    """
    orig_shape = x.shape

    # Precompute per-component scalars (tiny, plain-JAX glue).
    stds = jnp.exp(log_stds.astype(jnp.float32)) + 1e-6
    variances = stds ** 2
    log_weights = jax.nn.log_softmax(weights.astype(jnp.float32), axis=-1)
    scale = -0.5 / variances                                    # multiplies (x - m)^2
    const = log_weights - 0.5 * jnp.log(2.0 * np.pi * variances)
    means_f = means.astype(jnp.float32)
    n_comp = means_f.shape[0]

    xf = x.reshape(-1)
    n = xf.shape[0]
    if n == 0:
        return jnp.zeros(orig_shape, jnp.float32)

    # Stream 16-bit inputs natively (upcast happens in-kernel).
    if x.dtype == jnp.bfloat16 or x.dtype == jnp.float16:
        min_rows = 16          # sublane packing for 16-bit dtypes
        x_in = xf
    else:
        min_rows = 8
        x_in = xf.astype(jnp.float32)

    rows = n // _LANES
    tail = n - rows * _LANES

    outputs = []
    if rows > 0:
        x_main = x_in[: rows * _LANES] if tail else x_in   # zero-copy when aligned
        x2d = x_main.reshape(rows, _LANES)

        tile_rows, steps = _choose_tiling(rows, min_rows, _num_tensorcores())
        kernel = functools.partial(_mog_kernel, n_components=n_comp)

        out2d = pl.pallas_call(
            kernel,
            out_shape=jax.ShapeDtypeStruct((rows, _LANES), jnp.float32),
            grid_spec=pltpu.PrefetchScalarGridSpec(
                num_scalar_prefetch=0,
                grid=(steps,),
                in_specs=[
                    pl.BlockSpec(memory_space=pltpu.SMEM),  # means
                    pl.BlockSpec(memory_space=pltpu.SMEM),  # scale = -0.5/var
                    pl.BlockSpec(memory_space=pltpu.SMEM),  # const = log_w - 0.5*log(2*pi*var)
                    pl.BlockSpec((tile_rows, _LANES), lambda i: (i, 0)),
                ],
                out_specs=pl.BlockSpec((tile_rows, _LANES), lambda i: (i, 0)),
            ),
            compiler_params=pltpu.CompilerParams(
                dimension_semantics=("parallel",),
                # Double-buffered 4 MiB in + 4 MiB out tiles stay well inside
                # 32 MiB; portable across v5e/v6e (128 MiB) and v7x (64 MiB).
                vmem_limit_bytes=32 * 1024 * 1024,
            ),
        )(means_f, scale, const, x2d)
        outputs.append(out2d.reshape(-1))

    if tail > 0:
        # < 128 leftover elements: plain JAX, avoids a full pad/copy HBM pass.
        xt = x_in[rows * _LANES:].astype(jnp.float32)
        lm = scale * (xt[:, None] - means_f) ** 2 + const
        outputs.append(jax.scipy.special.logsumexp(lm, axis=-1))

    out = outputs[0] if len(outputs) == 1 else jnp.concatenate(outputs)
    return out.reshape(orig_shape)


def mog_log_prob_ref(x, weights, means, log_stds):
    """Pure-JAX reference matching the PyTorch forward."""
    x = x.astype(jnp.float32)[..., None]
    stds = jnp.exp(log_stds) + 1e-6
    variances = stds ** 2
    log_densities = -0.5 * (x - means) ** 2 / variances \
        - 0.5 * jnp.log(2.0 * np.pi * variances)
    log_weights = jax.nn.log_softmax(weights, axis=-1)
    log_mixture = log_densities + log_weights
    return jax.scipy.special.logsumexp(log_mixture, axis=-1)


if __name__ == "__main__":
    # Deterministic parameter init, exactly as MoG.__init__ (n_components=2).
    weights = jnp.ones((N_COMPONENTS,), jnp.float32) / N_COMPONENTS
    means = jnp.array([-2.0, 2.0], jnp.float32)
    log_stds = jnp.zeros((N_COMPONENTS,), jnp.float32) - 0.5

    key = jax.random.PRNGKey(0)

    # Main input: 128-aligned -> zero-copy reshape, single big (or per-core) tile.
    x = jax.random.normal(key, (64, 1024), dtype=jnp.float32) * 3.0
    out = jax.block_until_ready(mog_log_prob(x, weights, means, log_stds))
    ref = mog_log_prob_ref(x, weights, means, log_stds)
    np.testing.assert_allclose(np.asarray(out), np.asarray(ref),
                               rtol=1e-5, atol=1e-5)

    # Ragged total size (rows not a multiple of 8, tail < 128 elements):
    # exercises the masked-boundary block and the plain-JAX tail path.
    x_mid = jax.random.normal(jax.random.PRNGKey(1), (3, 300), dtype=jnp.float32) * 2.0
    out_m = jax.block_until_ready(mog_log_prob(x_mid, weights, means, log_stds))
    ref_m = mog_log_prob_ref(x_mid, weights, means, log_stds)
    np.testing.assert_allclose(np.asarray(out_m), np.asarray(ref_m),
                               rtol=1e-5, atol=1e-5)

    # Tiny input: pure tail path.
    x_small = jax.random.normal(jax.random.PRNGKey(2), (3, 7), dtype=jnp.float32)
    out_s = jax.block_until_ready(mog_log_prob(x_small, weights, means, log_stds))
    ref_s = mog_log_prob_ref(x_small, weights, means, log_stds)
    np.testing.assert_allclose(np.asarray(out_s), np.asarray(ref_s),
                               rtol=1e-5, atol=1e-5)

    # bf16 input streamed natively, f32 output (matches torch promotion).
    x_bf = (jax.random.normal(jax.random.PRNGKey(3), (16, 256), dtype=jnp.float32)
            * 2.0).astype(jnp.bfloat16)
    out_b = jax.block_until_ready(mog_log_prob(x_bf, weights, means, log_stds))
    ref_b = mog_log_prob_ref(x_bf, weights, means, log_stds)
    np.testing.assert_allclose(np.asarray(out_b), np.asarray(ref_b),
                               rtol=1e-2, atol=1e-2)

    print("KERNEL_OK")
</pallas_src>

<mosaic_0001>
module attributes {stable_mosaic.version = 11 : i64} {
  func.func @_mog_kernel(%arg0: i32, %arg1: memref<2xf32, #tpu.memory_space<smem>>, %arg2: memref<2xf32, #tpu.memory_space<smem>>, %arg3: memref<2xf32, #tpu.memory_space<smem>>, %arg4: memref<512x128xf32, #tpu.memory_space<vmem>>, %arg5: memref<512x128xf32, #tpu.memory_space<vmem>>) attributes {dimension_semantics = [#tpu.dimension_semantics<parallel>], iteration_bounds = array<i64: 1>, scalar_prefetch = 0 : i64, scratch_operands = 0 : i64, tpu.core_type = #tpu.core_type<tc>, window_params = [{transform_indices = @transform_0, window_bounds = array<i64: 2>}, {transform_indices = @transform_1, window_bounds = array<i64: 2>}, {transform_indices = @transform_2, window_bounds = array<i64: 2>}, {transform_indices = @transform_3, window_bounds = array<i64: 512, 128>}, {transform_indices = @transform_4, window_bounds = array<i64: 512, 128>}]} {
    %c0 = arith.constant 0 : index
    %c0_0 = arith.constant 0 : index
    %0 = vector.load %arg4[%c0, %c0_0] : memref<512x128xf32, #tpu.memory_space<vmem>>, vector<512x128xf32>
    %c0_1 = arith.constant 0 : index
    %1 = memref.load %arg1[%c0_1] : memref<2xf32, #tpu.memory_space<smem>>
    %2 = vector.broadcast %1 : f32 to vector<512x128xf32>
    %3 = arith.subf %0, %2 : vector<512x128xf32>
    %4 = arith.mulf %3, %3 : vector<512x128xf32>
    %c0_2 = arith.constant 0 : index
    %5 = memref.load %arg2[%c0_2] : memref<2xf32, #tpu.memory_space<smem>>
    %6 = vector.broadcast %5 : f32 to vector<512x128xf32>
    %7 = arith.mulf %4, %6 : vector<512x128xf32>
    %c0_3 = arith.constant 0 : index
    %8 = memref.load %arg3[%c0_3] : memref<2xf32, #tpu.memory_space<smem>>
    %9 = vector.broadcast %8 : f32 to vector<512x128xf32>
    %10 = arith.addf %7, %9 : vector<512x128xf32>
    %c1 = arith.constant 1 : index
    %11 = memref.load %arg1[%c1] : memref<2xf32, #tpu.memory_space<smem>>
    %12 = vector.broadcast %11 : f32 to vector<512x128xf32>
    %13 = arith.subf %0, %12 : vector<512x128xf32>
    %14 = arith.mulf %13, %13 : vector<512x128xf32>
    %c1_4 = arith.constant 1 : index
    %15 = memref.load %arg2[%c1_4] : memref<2xf32, #tpu.memory_space<smem>>
    %16 = vector.broadcast %15 : f32 to vector<512x128xf32>
    %17 = arith.mulf %14, %16 : vector<512x128xf32>
    %c1_5 = arith.constant 1 : index
    %18 = memref.load %arg3[%c1_5] : memref<2xf32, #tpu.memory_space<smem>>
    %19 = vector.broadcast %18 : f32 to vector<512x128xf32>
    %20 = arith.addf %17, %19 : vector<512x128xf32>
    %21 = arith.maximumf %10, %20 : vector<512x128xf32>
    %22 = arith.subf %10, %20 : vector<512x128xf32>
    %23 = math.absf %22 : vector<512x128xf32>
    %cst = arith.constant 0.000000e+00 : f32
    %24 = vector.broadcast %cst : f32 to vector<512x128xf32>
    %25 = arith.subf %24, %23 : vector<512x128xf32>
    %26 = math.exp %25 : vector<512x128xf32>
    %cst_6 = arith.constant 1.000000e+00 : f32
    %27 = vector.broadcast %cst_6 : f32 to vector<512x128xf32>
    %28 = arith.addf %27, %26 : vector<512x128xf32>
    %29 = math.log %28 : vector<512x128xf32>
    %30 = arith.addf %21, %29 : vector<512x128xf32>
    %c0_7 = arith.constant 0 : index
    %c0_8 = arith.constant 0 : index
    %31 = vector.load %arg5[%c0_7, %c0_8] : memref<512x128xf32, #tpu.memory_space<vmem>>, vector<512x128xf32>
    tpu.vector_store %arg5[%c0_7, %c0_8], %30 {strides = array<i32>} : memref<512x128xf32, #tpu.memory_space<vmem>>, vector<512x128xf32>,
    return
  }
  func.func @transform_0(%arg0: i32) -> i32 {
    %c0_i32 = arith.constant 0 : i32
    %c0_i32_0 = arith.constant 0 : i32
    return %c0_i32 : i32
  }
  func.func @transform_1(%arg0: i32) -> i32 {
    %c0_i32 = arith.constant 0 : i32
    %c0_i32_0 = arith.constant 0 : i32
    return %c0_i32 : i32
  }
  func.func @transform_2(%arg0: i32) -> i32 {
    %c0_i32 = arith.constant 0 : i32
    %c0_i32_0 = arith.constant 0 : i32
    return %c0_i32 : i32
  }
  func.func @transform_3(%arg0: i32) -> (i32, i32) {
    %c0_i32 = arith.constant 0 : i32
    %c0_i32_0 = arith.constant 0 : i32
    return %arg0, %c0_i32 : i32, i32
  }
  func.func @transform_4(%arg0: i32) -> (i32, i32) {
    %c0_i32 = arith.constant 0 : i32
    %c0_i32_0 = arith.constant 0 : i32
    return %arg0, %c0_i32 : i32, i32
  }
}

</mosaic_0001>

<llo_original>
// kernel: tpu_custom_call.1
$region0: #{tpu_custom_call.1}
  #allocation0 [shape = 'u32[]', space=smem, size = 0x4, offset = 0x4, fixed_abs, tag = 'smem constant byte address 0x4 - core index']
  #allocation1 [shape = 'u32[72,128]{1,0:T(1,128)}', space=vmem, size = 0x9000, scoped, tag = 'internal scratch']
  %s0 = inlined_call_operand.hbm [shape: f32[2], index: 0, kind: input, shape index: {}]
  %s1 = inlined_call_operand.hbm [shape: f32[2], index: 1, kind: input, shape index: {}]
  %s2 = inlined_call_operand.vmem [shape: f32[2], index: 2, kind: input, shape index: {}]
  %s3 = inlined_call_operand.hbm [shape: f32[512,128], index: 3, kind: input, shape index: {}]
  %s4 = inlined_call_operand.hbm [shape: f32[512,128], index: 4, kind: output, shape index: {}]
  %s5 = sld [smem:[#allocation0]]
  $region42: #{tpu_custom_call.1} parent=0
    _
  %s7 = ssub.s32 1, %s5
  %s8 = scalar_select 0, %s7, %s5
  $region1: #{tpu_custom_call.1} parent=0
    #allocation2 [shape = 'u8[512]{0}', space=smem, size = 0x200, scoped, tag = 'input window, operand 0, single buffered']
    #allocation3 [shape = 's32[1]{0}', space=sflag, size = 0x4, scoped, tag = 'scoped memory for tpu_custom_call.1']
    #allocation4 [shape = 's32[1]{0}', space=sflag, size = 0x4, scoped, tag = 'scoped memory for tpu_custom_call.1']
    #allocation5 [shape = 's32[1]{0}', space=sflag, size = 0x4, scoped, tag = 'scoped memory for tpu_custom_call.1']
    #allocation6 [shape = 's32[1]{0}', space=sflag, size = 0x4, scoped, tag = 'scoped memory for tpu_custom_call.1']
    #allocation7 [shape = 'u8[512]{0}', space=smem, size = 0x200, scoped, tag = 'input window, operand 1, single buffered']
    #allocation8 [shape = 's32[1]{0}', space=sflag, size = 0x4, scoped, tag = 'scoped memory for tpu_custom_call.1']
    #allocation9 [shape = 'u8[512]{0}', space=smem, size = 0x200, scoped, tag = 'input window, operand 2, single buffered']
    #allocation10 [shape = 'u8[262144]{0}', space=vmem, size = 0x40000, scoped, tag = 'input window, operand 3, single buffered']
    #allocation11 [shape = 'u8[262144]{0}', space=vmem, size = 0x40000, scoped, tag = 'output window, operand 0, single buffered']
    %9 = vsyncpa [#allocation5], 0
    %10 = vsyncpa [#allocation8], 0
    %11 = vsyncpa [#allocation6], 0
    %12 = vsyncpa [#allocation3], 0
    %13 = vsyncpa [#allocation4], 0
    // Predicated region
    $region2: #{tpu_custom_call.1} parent=1 // pred_check
      _
    $region3: #{tpu_custom_call.1} parent=1 // pred_check_branch
      %15 = sbr.rel (0) target = $region5
    $region4: #{tpu_custom_call.1} parent=1 // pred_region
      %17 = vsyncadd [#allocation5], 0
      %s19 = sshll.u32 %s0, 4
      %s20 = int_to_ptr.hbm [resolvable:$true] %s19
      %22 = dma.hbm_to_smem %s20, 16, [#allocation2], [#allocation5]
    $region5: #{tpu_custom_call.1} parent=1 // pred_fallthru
      _
    // Predicated region
    $region6: #{tpu_custom_call.1} parent=1 // pred_check
      _
    $region7: #{tpu_custom_call.1} parent=1 // pred_check_branch
      %24 = sbr.rel (0) target = $region9
    $region8: #{tpu_custom_call.1} parent=1 // pred_region
      %26 = vsyncadd [#allocation8], 0
      %s28 = sshll.u32 %s1, 4
      %s29 = int_to_ptr.hbm [resolvable:$true] %s28
      %31 = dma.hbm_to_smem %s29, 16, [#allocation7], [#allocation8]
    $region9: #{tpu_custom_call.1} parent=1 // pred_fallthru
      _
    // Predicated region
    $region10: #{tpu_custom_call.1} parent=1 // pred_check
      _
    $region11: #{tpu_custom_call.1} parent=1 // pred_check_branch
      %33 = sbr.rel (0) target = $region13
    $region12: #{tpu_custom_call.1} parent=1 // pred_region
      %35 = vsyncadd [#allocation6], 0
      %s37 = sshll.u32 %s2, 4
      %s38 = int_to_ptr.vmem [resolvable:$true] %s37
      %40 = dma.vmem_to_smem %s38, 16, [#allocation9], [#allocation6]
    $region13: #{tpu_custom_call.1} parent=1 // pred_fallthru
      _
    // Predicated region
    $region14: #{tpu_custom_call.1} parent=1 // pred_check
      _
    $region15: #{tpu_custom_call.1} parent=1 // pred_check_branch
      %42 = sbr.rel (0) target = $region17
    $region16: #{tpu_custom_call.1} parent=1 // pred_region
      %44 = vsyncadd [#allocation3], 0
      %s45 = sshll.u32 %s3, 4
      %s46 = int_to_ptr.hbm [resolvable:$true] %s45
      %s47 = sshll.u32 [#allocation10], 4
      %s48 = int_to_ptr.vmem [resolvable:$true] %s47
      %53 = dma.hbm_to_vmem [thread:$0]  %s46, 8192, %s48, [#allocation3], 128, 128, 8
    $region17: #{tpu_custom_call.1} parent=1 // pred_fallthru
      _
    // Predicated region
    $region18: #{tpu_custom_call.1} parent=1 // pred_check
      _
    $region19: #{tpu_custom_call.1} parent=1 // pred_check_branch
      %55 = sbr.rel (0) target = $region21
    $region20: #{tpu_custom_call.1} parent=1 // pred_region
      %57 = dma.done [#allocation5], 16
    $region21: #{tpu_custom_call.1} parent=1 // pred_fallthru
      _
    // Predicated region
    $region22: #{tpu_custom_call.1} parent=1 // pred_check
      _
    $region23: #{tpu_custom_call.1} parent=1 // pred_check_branch
      %59 = sbr.rel (0) target = $region25
    $region24: #{tpu_custom_call.1} parent=1 // pred_region
      %61 = dma.done [#allocation8], 16
    $region25: #{tpu_custom_call.1} parent=1 // pred_fallthru
      _
    // Predicated region
    $region26: #{tpu_custom_call.1} parent=1 // pred_check
      _
    $region27: #{tpu_custom_call.1} parent=1 // pred_check_branch
      %63 = sbr.rel (0) target = $region29
    $region28: #{tpu_custom_call.1} parent=1 // pred_region
      %65 = dma.done [#allocation6], 16
    $region29: #{tpu_custom_call.1} parent=1 // pred_fallthru
      _
    // Predicated region
    $region30: #{tpu_custom_call.1} parent=1 // pred_check
      _
    $region31: #{tpu_custom_call.1} parent=1 // pred_check_branch
      %67 = sbr.rel (0) target = $region33
    $region32: #{tpu_custom_call.1} parent=1 // pred_region
      %69 = dma.done [#allocation3], 8192
    $region33: #{tpu_custom_call.1} parent=1 // pred_fallthru
      _
    %70 = sfence
    %v71 = vld [vmem:[#allocation10] sm:$0xff]
    %v72 = vld [vmem:[#allocation10 + $0x8] sm:$0xff]
    %v73 = vld [vmem:[#allocation10 + $0x10] sm:$0xff]
    %v74 = vld [vmem:[#allocation10 + $0x18] sm:$0xff]
    %v75 = vld [vmem:[#allocation10 + $0x20] sm:$0xff]
    %v76 = vld [vmem:[#allocation10 + $0x28] sm:$0xff]
    %v77 = vld [vmem:[#allocation10 + $0x30] sm:$0xff]
    %v78 = vld [vmem:[#allocation10 + $0x38] sm:$0xff]
    %v79 = vld [vmem:[#allocation10 + $0x40] sm:$0xff]
    %v80 = vld [vmem:[#allocation10 + $0x48] sm:$0xff]
    %v81 = vld [vmem:[#allocation10 + $0x50] sm:$0xff]
    %v82 = vld [vmem:[#allocation10 + $0x58] sm:$0xff]
    %v83 = vld [vmem:[#allocation10 + $0x60] sm:$0xff]
    %v84 = vld [vmem:[#allocation10 + $0x68] sm:$0xff]
    %v85 = vld [vmem:[#allocation10 + $0x70] sm:$0xff]
    %v86 = vld [vmem:[#allocation10 + $0x78] sm:$0xff]
    %v87 = vld [vmem:[#allocation10 + $0x80] sm:$0xff]
    %v88 = vld [vmem:[#allocation10 + $0x88] sm:$0xff]
    %v89 = vld [vmem:[#allocation10 + $0x90] sm:$0xff]
    %v90 = vld [vmem:[#allocation10 + $0x98] sm:$0xff]
    %v91 = vld [vmem:[#allocation10 + $0xa0] sm:$0xff]
    %v92 = vld [vmem:[#allocation10 + $0xa8] sm:$0xff]
    %v93 = vld [vmem:[#allocation10 + $0xb0] sm:$0xff]
    %v94 = vld [vmem:[#allocation10 + $0xb8] sm:$0xff]
    %v95 = vld [vmem:[#allocation10 + $0xc0] sm:$0xff]
    %v96 = vld [vmem:[#allocation10 + $0xc8] sm:$0xff]
    %v97 = vld [vmem:[#allocation10 + $0xd0] sm:$0xff]
    %v98 = vld [vmem:[#allocation10 + $0xd8] sm:$0xff]
    %v99 = vld [vmem:[#allocation10 + $0xe0] sm:$0xff]
    %v100 = vld [vmem:[#allocation10 + $0xe8] sm:$0xff]
    %v101 = vld [vmem:[#allocation10 + $0xf0] sm:$0xff]
    %v102 = vld [vmem:[#allocation10 + $0xf8] sm:$0xff]
    %v103 = vld [vmem:[#allocation10 + $0x100] sm:$0xff]
    %v104 = vld [vmem:[#allocation10 + $0x108] sm:$0xff]
    %v105 = vld [vmem:[#allocation10 + $0x110] sm:$0xff]
    %v106 = vld [vmem:[#allocation10 + $0x118] sm:$0xff]
    %v107 = vld [vmem:[#allocation10 + $0x120] sm:$0xff]
    %v108 = vld [vmem:[#allocation10 + $0x128] sm:$0xff]
    %v109 = vld [vmem:[#allocation10 + $0x130] sm:$0xff]
    %v110 = vld [vmem:[#allocation10 + $0x138] sm:$0xff]
    %v111 = vld [vmem:[#allocation10 + $0x140] sm:$0xff]
    %v112 = vld [vmem:[#allocation10 + $0x148] sm:$0xff]
    %v113 = vld [vmem:[#allocation10 + $0x150] sm:$0xff]
    %v114 = vld [vmem:[#allocation10 + $0x158] sm:$0xff]
    %v115 = vld [vmem:[#allocation10 + $0x160] sm:$0xff]
    %v116 = vld [vmem:[#allocation10 + $0x168] sm:$0xff]
    %v117 = vld [vmem:[#allocation10 + $0x170] sm:$0xff]
    %v118 = vld [vmem:[#allocation10 + $0x178] sm:$0xff]
    %v119 = vld [vmem:[#allocation10 + $0x180] sm:$0xff]
    %v120 = vld [vmem:[#allocation10 + $0x188] sm:$0xff]
    %v121 = vld [vmem:[#allocation10 + $0x190] sm:$0xff]
    %v122 = vld [vmem:[#allocation10 + $0x198] sm:$0xff]
    %v123 = vld [vmem:[#allocation10 + $0x1a0] sm:$0xff]
    %v124 = vld [vmem:[#allocation10 + $0x1a8] sm:$0xff]
    %v125 = vld [vmem:[#allocation10 + $0x1b0] sm:$0xff]
    %v126 = vld [vmem:[#allocation10 + $0x1b8] sm:$0xff]
    %v127 = vld [vmem:[#allocation10 + $0x1c0] sm:$0xff]
    %v128 = vld [vmem:[#allocation10 + $0x1c8] sm:$0xff]
    %v129 = vld [vmem:[#allocation10 + $0x1d0] sm:$0xff]
    %v130 = vld [vmem:[#allocation10 + $0x1d8] sm:$0xff]
    %v131 = vld [vmem:[#allocation10 + $0x1e0] sm:$0xff]
    %v132 = vld [vmem:[#allocation10 + $0x1e8] sm:$0xff]
    %v133 = vld [vmem:[#allocation10 + $0x1f0] sm:$0xff]
    %v134 = vld [vmem:[#allocation10 + $0x1f8] sm:$0xff]
    %s135 = sld [smem:[#allocation2]]
    %v136 = vstv %s135
    %v137 = vsub.f32 %v71, %v136
    %v138 = vsub.f32 %v72, %v136
    %v139 = vsub.f32 %v73, %v136
    %v140 = vsub.f32 %v74, %v136
    %v141 = vsub.f32 %v75, %v136
    %v142 = vsub.f32 %v76, %v136
    %v143 = vsub.f32 %v77, %v136
    %v144 = vsub.f32 %v78, %v136
    %v145 = vsub.f32 %v79, %v136
    %v146 = vsub.f32 %v80, %v136
    %v147 = vsub.f32 %v81, %v136
    %v148 = vsub.f32 %v82, %v136
    %v149 = vsub.f32 %v83, %v136
    %v150 = vsub.f32 %v84, %v136
    %v151 = vsub.f32 %v85, %v136
    %v152 = vsub.f32 %v86, %v136
    %v153 = vsub.f32 %v87, %v136
    %v154 = vsub.f32 %v88, %v136
    %v155 = vsub.f32 %v89, %v136
    %v156 = vsub.f32 %v90, %v136
    %v157 = vsub.f32 %v91, %v136
    %v158 = vsub.f32 %v92, %v136
    %v159 = vsub.f32 %v93, %v136
    %v160 = vsub.f32 %v94, %v136
    %v161 = vsub.f32 %v95, %v136
    %v162 = vsub.f32 %v96, %v136
    %v163 = vsub.f32 %v97, %v136
    %v164 = vsub.f32 %v98, %v136
    %v165 = vsub.f32 %v99, %v136
    %v166 = vsub.f32 %v100, %v136
    %v167 = vsub.f32 %v101, %v136
    %v168 = vsub.f32 %v102, %v136
    %v169 = vsub.f32 %v103, %v136
    %v170 = vsub.f32 %v104, %v136
    %v171 = vsub.f32 %v105, %v136
    %v172 = vsub.f32 %v106, %v136
    %v173 = vsub.f32 %v107, %v136
    %v174 = vsub.f32 %v108, %v136
    %v175 = vsub.f32 %v109, %v136
    %v176 = vsub.f32 %v110, %v136
    %v177 = vsub.f32 %v111, %v136
    %v178 = vsub.f32 %v112, %v136
    %v179 = vsub.f32 %v113, %v136
    %v180 = vsub.f32 %v114, %v136
    %v181 = vsub.f32 %v115, %v136
    %v182 = vsub.f32 %v116, %v136
    %v183 = vsub.f32 %v117, %v136
    %v184 = vsub.f32 %v118, %v136
    %v185 = vsub.f32 %v119, %v136
    %v186 = vsub.f32 %v120, %v136
    %v187 = vsub.f32 %v121, %v136
    %v188 = vsub.f32 %v122, %v136
    %v189 = vsub.f32 %v123, %v136
    %v190 = vsub.f32 %v124, %v136
    %v191 = vsub.f32 %v125, %v136
    %v192 = vsub.f32 %v126, %v136
    %v193 = vsub.f32 %v127, %v136
    %v194 = vsub.f32 %v128, %v136
    %v195 = vsub.f32 %v129, %v136
    %v196 = vsub.f32 %v130, %v136
    %v197 = vsub.f32 %v131, %v136
    %v198 = vsub.f32 %v132, %v136
    %v199 = vsub.f32 %v133, %v136
    %v200 = vsub.f32 %v134, %v136
    %v201 = vmul.f32 %v137, %v137
    %v202 = vmul.f32 %v138, %v138
    %v203 = vmul.f32 %v139, %v139
    %v204 = vmul.f32 %v140, %v140
    %v205 = vmul.f32 %v141, %v141
    %v206 = vmul.f32 %v142, %v142
    %v207 = vmul.f32 %v143, %v143
    %v208 = vmul.f32 %v144, %v144
    %v209 = vmul.f32 %v145, %v145
    %v210 = vmul.f32 %v146, %v146
    %v211 = vmul.f32 %v147, %v147
    %v212 = vmul.f32 %v148, %v148
    %v213 = vmul.f32 %v149, %v149
    %v214 = vmul.f32 %v150, %v150
    %v215 = vmul.f32 %v151, %v151
    %v216 = vmul.f32 %v152, %v152
    %v217 = vmul.f32 %v153, %v153
    %v218 = vmul.f32 %v154, %v154
    %v219 = vmul.f32 %v155, %v155
    %v220 = vmul.f32 %v156, %v156
    %v221 = vmul.f32 %v157, %v157
    %v222 = vmul.f32 %v158, %v158
    %v223 = vmul.f32 %v159, %v159
    %v224 = vmul.f32 %v160, %v160
    %v225 = vmul.f32 %v161, %v161
    %v226 = vmul.f32 %v162, %v162
    %v227 = vmul.f32 %v163, %v163
    %v228 = vmul.f32 %v164, %v164
    %v229 = vmul.f32 %v165, %v165
    %v230 = vmul.f32 %v166, %v166
    %v231 = vmul.f32 %v167, %v167
    %v232 = vmul.f32 %v168, %v168
    %v233 = vmul.f32 %v169, %v169
    %v234 = vmul.f32 %v170, %v170
    %v235 = vmul.f32 %v171, %v171
    %v236 = vmul.f32 %v172, %v172
    %v237 = vmul.f32 %v173, %v173
    %v238 = vmul.f32 %v174, %v174
    %v239 = vmul.f32 %v175, %v175
    %v240 = vmul.f32 %v176, %v176
    %v241 = vmul.f32 %v177, %v177
    %v242 = vmul.f32 %v178, %v178
    %v243 = vmul.f32 %v179, %v179
    %v244 = vmul.f32 %v180, %v180
    %v245 = vmul.f32 %v181, %v181
    %v246 = vmul.f32 %v182, %v182
    %v247 = vmul.f32 %v183, %v183
    %v248 = vmul.f32 %v184, %v184
    %v249 = vmul.f32 %v185, %v185
    %v250 = vmul.f32 %v186, %v186
    %v251 = vmul.f32 %v187, %v187
    %v252 = vmul.f32 %v188, %v188
    %v253 = vmul.f32 %v189, %v189
    %v254 = vmul.f32 %v190, %v190
    %v255 = vmul.f32 %v191, %v191
    %v256 = vmul.f32 %v192, %v192
    %v257 = vmul.f32 %v193, %v193
    %v258 = vmul.f32 %v194, %v194
    %v259 = vmul.f32 %v195, %v195
    %v260 = vmul.f32 %v196, %v196
    %v261 = vmul.f32 %v197, %v197
    %v262 = vmul.f32 %v198, %v198
    %v263 = vmul.f32 %v199, %v199
    %v264 = vmul.f32 %v200, %v200
    %s265 = sld [smem:[#allocation7]]
    %v266 = vstv %s265
    %v267 = vmul.f32 %v201, %v266
    %v268 = vmul.f32 %v202, %v266
    %v269 = vmul.f32 %v203, %v266
    %v270 = vmul.f32 %v204, %v266
    %v271 = vmul.f32 %v205, %v266
    %v272 = vmul.f32 %v206, %v266
    %v273 = vmul.f32 %v207, %v266
    %v274 = vmul.f32 %v208, %v266
    %v275 = vmul.f32 %v209, %v266
    %v276 = vmul.f32 %v210, %v266
    %v277 = vmul.f32 %v211, %v266
    %v278 = vmul.f32 %v212, %v266
    %v279 = vmul.f32 %v213, %v266
    %v280 = vmul.f32 %v214, %v266
    %v281 = vmul.f32 %v215, %v266
    %v282 = vmul.f32 %v216, %v266
    %v283 = vmul.f32 %v217, %v266
    %v284 = vmul.f32 %v218, %v266
    %v285 = vmul.f32 %v219, %v266
    %v286 = vmul.f32 %v220, %v266
    %v287 = vmul.f32 %v221, %v266
    %v288 = vmul.f32 %v222, %v266
    %v289 = vmul.f32 %v223, %v266
    %v290 = vmul.f32 %v224, %v266
    %v291 = vmul.f32 %v225, %v266
    %v292 = vmul.f32 %v226, %v266
    %v293 = vmul.f32 %v227, %v266
    %v294 = vmul.f32 %v228, %v266
    %v295 = vmul.f32 %v229, %v266
    %v296 = vmul.f32 %v230, %v266
    %v297 = vmul.f32 %v231, %v266
    %v298 = vmul.f32 %v232, %v266
    %v299 = vmul.f32 %v233, %v266
    %v300 = vmul.f32 %v234, %v266
    %v301 = vmul.f32 %v235, %v266
    %v302 = vmul.f32 %v236, %v266
    %v303 = vmul.f32 %v237, %v266
    %v304 = vmul.f32 %v238, %v266
    %v305 = vmul.f32 %v239, %v266
    %v306 = vmul.f32 %v240, %v266
    %v307 = vmul.f32 %v241, %v266
    %v308 = vmul.f32 %v242, %v266
    %v309 = vmul.f32 %v243, %v266
    %v310 = vmul.f32 %v244, %v266
    %v311 = vmul.f32 %v245, %v266
    %v312 = vmul.f32 %v246, %v266
    %v313 = vmul.f32 %v247, %v266
    %v314 = vmul.f32 %v248, %v266
    %v315 = vmul.f32 %v249, %v266
    %v316 = vmul.f32 %v250, %v266
    %v317 = vmul.f32 %v251, %v266
    %v318 = vmul.f32 %v252, %v266
    %v319 = vmul.f32 %v253, %v266
    %v320 = vmul.f32 %v254, %v266
    %v321 = vmul.f32 %v255, %v266
    %v322 = vmul.f32 %v256, %v266
    %v323 = vmul.f32 %v257, %v266
    %v324 = vmul.f32 %v258, %v266
    %v325 = vmul.f32 %v259, %v266
    %v326 = vmul.f32 %v260, %v266
    %v327 = vmul.f32 %v261, %v266
    %v328 = vmul.f32 %v262, %v266
    %v329 = vmul.f32 %v263, %v266
    %v330 = vmul.f32 %v264, %v266
    %s331 = sld [smem:[#allocation9]]
    %v332 = vstv %s331
    %v333 = vadd.f32 %v267, %v332
    %v334 = vadd.f32 %v268, %v332
    %v335 = vadd.f32 %v269, %v332
    %v336 = vadd.f32 %v270, %v332
    %v337 = vadd.f32 %v271, %v332
    %v338 = vadd.f32 %v272, %v332
    %v339 = vadd.f32 %v273, %v332
    %v340 = vadd.f32 %v274, %v332
    %v341 = vadd.f32 %v275, %v332
    %v342 = vadd.f32 %v276, %v332
    %v343 = vadd.f32 %v277, %v332
    %v344 = vadd.f32 %v278, %v332
    %v345 = vadd.f32 %v279, %v332
    %v346 = vadd.f32 %v280, %v332
    %v347 = vadd.f32 %v281, %v332
    %v348 = vadd.f32 %v282, %v332
    %v349 = vadd.f32 %v283, %v332
    %v350 = vadd.f32 %v284, %v332
    %v351 = vadd.f32 %v285, %v332
    %v352 = vadd.f32 %v286, %v332
    %v353 = vadd.f32 %v287, %v332
    %v354 = vadd.f32 %v288, %v332
    %v355 = vadd.f32 %v289, %v332
    %v356 = vadd.f32 %v290, %v332
    %v357 = vadd.f32 %v291, %v332
    %v358 = vadd.f32 %v292, %v332
    %v359 = vadd.f32 %v293, %v332
    %v360 = vadd.f32 %v294, %v332
    %v361 = vadd.f32 %v295, %v332
    %v362 = vadd.f32 %v296, %v332
    %v363 = vadd.f32 %v297, %v332
    %v364 = vadd.f32 %v298, %v332
    %v365 = vadd.f32 %v299, %v332
    %v366 = vadd.f32 %v300, %v332
    %v367 = vadd.f32 %v301, %v332
    %v368 = vadd.f32 %v302, %v332
    %v369 = vadd.f32 %v303, %v332
    %v370 = vadd.f32 %v304, %v332
    %v371 = vadd.f32 %v305, %v332
    %v372 = vadd.f32 %v306, %v332
    %v373 = vadd.f32 %v307, %v332
    %v374 = vadd.f32 %v308, %v332
    %v375 = vadd.f32 %v309, %v332
    %v376 = vadd.f32 %v310, %v332
    %v377 = vadd.f32 %v311, %v332
    %v378 = vadd.f32 %v312, %v332
    %v379 = vadd.f32 %v313, %v332
    %v380 = vadd.f32 %v314, %v332
    %v381 = vadd.f32 %v315, %v332
    %v382 = vadd.f32 %v316, %v332
    %v383 = vadd.f32 %v317, %v332
    %v384 = vadd.f32 %v318, %v332
    %v385 = vadd.f32 %v319, %v332
    %v386 = vadd.f32 %v320, %v332
    %v387 = vadd.f32 %v321, %v332
    %v388 = vadd.f32 %v322, %v332
    %v389 = vadd.f32 %v323, %v332
    %v390 = vadd.f32 %v324, %v332
    %v391 = vadd.f32 %v325, %v332
    %v392 = vadd.f32 %v326, %v332
    %v393 = vadd.f32 %v327, %v332
    %v394 = vadd.f32 %v328, %v332
    %v395 = vadd.f32 %v329, %v332
    %v396 = vadd.f32 %v330, %v332
    %s397 = sld [smem:[#allocation2 + $0x1]]
    %v398 = vstv %s397
    %v399 = vsub.f32 %v71, %v398
    %v400 = vsub.f32 %v72, %v398
    %v401 = vsub.f32 %v73, %v398
    %v402 = vsub.f32 %v74, %v398
    %v403 = vsub.f32 %v75, %v398
    %v404 = vsub.f32 %v76, %v398
    %v405 = vsub.f32 %v77, %v398
    %v406 = vsub.f32 %v78, %v398
    %v407 = vsub.f32 %v79, %v398
    %v408 = vsub.f32 %v80, %v398
    %v409 = vsub.f32 %v81, %v398
    %v410 = vsub.f32 %v82, %v398
    %v411 = vsub.f32 %v83, %v398
    %v412 = vsub.f32 %v84, %v398
    %v413 = vsub.f32 %v85, %v398
    %v414 = vsub.f32 %v86, %v398
    %v415 = vsub.f32 %v87, %v398
    %v416 = vsub.f32 %v88, %v398
    %v417 = vsub.f32 %v89, %v398
    %v418 = vsub.f32 %v90, %v398
    %v419 = vsub.f32 %v91, %v398
    %v420 = vsub.f32 %v92, %v398
    %v421 = vsub.f32 %v93, %v398
    %v422 = vsub.f32 %v94, %v398
    %v423 = vsub.f32 %v95, %v398
    %v424 = vsub.f32 %v96, %v398
    %v425 = vsub.f32 %v97, %v398
    %v426 = vsub.f32 %v98, %v398
    %v427 = vsub.f32 %v99, %v398
    %v428 = vsub.f32 %v100, %v398
    %v429 = vsub.f32 %v101, %v398
    %v430 = vsub.f32 %v102, %v398
    %v431 = vsub.f32 %v103, %v398
    %v432 = vsub.f32 %v104, %v398
    %v433 = vsub.f32 %v105, %v398
    %v434 = vsub.f32 %v106, %v398
    %v435 = vsub.f32 %v107, %v398
    %v436 = vsub.f32 %v108, %v398
    %v437 = vsub.f32 %v109, %v398
    %v438 = vsub.f32 %v110, %v398
    %v439 = vsub.f32 %v111, %v398
    %v440 = vsub.f32 %v112, %v398
    %v441 = vsub.f32 %v113, %v398
    %v442 = vsub.f32 %v114, %v398
    %v443 = vsub.f32 %v115, %v398
    %v444 = vsub.f32 %v116, %v398
    %v445 = vsub.f32 %v117, %v398
    %v446 = vsub.f32 %v118, %v398
    %v447 = vsub.f32 %v119, %v398
    %v448 = vsub.f32 %v120, %v398
    %v449 = vsub.f32 %v121, %v398
    %v450 = vsub.f32 %v122, %v398
    %v451 = vsub.f32 %v123, %v398
    %v452 = vsub.f32 %v124, %v398
    %v453 = vsub.f32 %v125, %v398
    %v454 = vsub.f32 %v126, %v398
    %v455 = vsub.f32 %v127, %v398
    %v456 = vsub.f32 %v128, %v398
    %v457 = vsub.f32 %v129, %v398
    %v458 = vsub.f32 %v130, %v398
    %v459 = vsub.f32 %v131, %v398
    %v460 = vsub.f32 %v132, %v398
    %v461 = vsub.f32 %v133, %v398
    %v462 = vsub.f32 %v134, %v398
    %v463 = vmul.f32 %v399, %v399
    %v464 = vmul.f32 %v400, %v400
    %v465 = vmul.f32 %v401, %v401
    %v466 = vmul.f32 %v402, %v402
    %v467 = vmul.f32 %v403, %v403
    %v468 = vmul.f32 %v404, %v404
    %v469 = vmul.f32 %v405, %v405
    %v470 = vmul.f32 %v406, %v406
    %v471 = vmul.f32 %v407, %v407
    %v472 = vmul.f32 %v408, %v408
    %v473 = vmul.f32 %v409, %v409
    %v474 = vmul.f32 %v410, %v410
    %v475 = vmul.f32 %v411, %v411
    %v476 = vmul.f32 %v412, %v412
    %v477 = vmul.f32 %v413, %v413
    %v478 = vmul.f32 %v414, %v414
    %v479 = vmul.f32 %v415, %v415
    %v480 = vmul.f32 %v416, %v416
    %v481 = vmul.f32 %v417, %v417
    %v482 = vmul.f32 %v418, %v418
    %v483 = vmul.f32 %v419, %v419
    %v484 = vmul.f32 %v420, %v420
    %v485 = vmul.f32 %v421, %v421
    %v486 = vmul.f32 %v422, %v422
    %v487 = vmul.f32 %v423, %v423
    %v488 = vmul.f32 %v424, %v424
    %v489 = vmul.f32 %v425, %v425
    %v490 = vmul.f32 %v426, %v426
    %v491 = vmul.f32 %v427, %v427
    %v492 = vmul.f32 %v428, %v428
    %v493 = vmul.f32 %v429, %v429
    %v494 = vmul.f32 %v430, %v430
    %v495 = vmul.f32 %v431, %v431
    %v496 = vmul.f32 %v432, %v432
    %v497 = vmul.f32 %v433, %v433
    %v498 = vmul.f32 %v434, %v434
    %v499 = vmul.f32 %v435, %v435
    %v500 = vmul.f32 %v436, %v436
    %v501 = vmul.f32 %v437, %v437
    %v502 = vmul.f32 %v438, %v438
    %v503 = vmul.f32 %v439, %v439
    %v504 = vmul.f32 %v440, %v440
    %v505 = vmul.f32 %v441, %v441
    %v506 = vmul.f32 %v442, %v442
    %v507 = vmul.f32 %v443, %v443
    %v508 = vmul.f32 %v444, %v444
    %v509 = vmul.f32 %v445, %v445
    %v510 = vmul.f32 %v446, %v446
    %v511 = vmul.f32 %v447, %v447
    %v512 = vmul.f32 %v448, %v448
    %v513 = vmul.f32 %v449, %v449
    %v514 = vmul.f32 %v450, %v450
    %v515 = vmul.f32 %v451, %v451
    %v516 = vmul.f32 %v452, %v452
    %v517 = vmul.f32 %v453, %v453
    %v518 = vmul.f32 %v454, %v454
    %v519 = vmul.f32 %v455, %v455
    %v520 = vmul.f32 %v456, %v456
    %v521 = vmul.f32 %v457, %v457
    %v522 = vmul.f32 %v458, %v458
    %v523 = vmul.f32 %v459, %v459
    %v524 = vmul.f32 %v460, %v460
    %v525 = vmul.f32 %v461, %v461
    %v526 = vmul.f32 %v462, %v462
    %s527 = sld [smem:[#allocation7 + $0x1]]
    %v528 = vstv %s527
    %v529 = vmul.f32 %v463, %v528
    %v530 = vmul.f32 %v464, %v528
    %v531 = vmul.f32 %v465, %v528
    %v532 = vmul.f32 %v466, %v528
    %v533 = vmul.f32 %v467, %v528
    %v534 = vmul.f32 %v468, %v528
    %v535 = vmul.f32 %v469, %v528
    %v536 = vmul.f32 %v470, %v528
    %v537 = vmul.f32 %v471, %v528
    %v538 = vmul.f32 %v472, %v528
    %v539 = vmul.f32 %v473, %v528
    %v540 = vmul.f32 %v474, %v528
    %v541 = vmul.f32 %v475, %v528
    %v542 = vmul.f32 %v476, %v528
    %v543 = vmul.f32 %v477, %v528
    %v544 = vmul.f32 %v478, %v528
    %v545 = vmul.f32 %v479, %v528
    %v546 = vmul.f32 %v480, %v528
    %v547 = vmul.f32 %v481, %v528
    %v548 = vmul.f32 %v482, %v528
    %v549 = vmul.f32 %v483, %v528
    %v550 = vmul.f32 %v484, %v528
    %v551 = vmul.f32 %v485, %v528
    %v552 = vmul.f32 %v486, %v528
    %v553 = vmul.f32 %v487, %v528
    %v554 = vmul.f32 %v488, %v528
    %v555 = vmul.f32 %v489, %v528
    %v556 = vmul.f32 %v490, %v528
    %v557 = vmul.f32 %v491, %v528
    %v558 = vmul.f32 %v492, %v528
    %v559 = vmul.f32 %v493, %v528
    %v560 = vmul.f32 %v494, %v528
    %v561 = vmul.f32 %v495, %v528
    %v562 = vmul.f32 %v496, %v528
    %v563 = vmul.f32 %v497, %v528
    %v564 = vmul.f32 %v498, %v528
    %v565 = vmul.f32 %v499, %v528
    %v566 = vmul.f32 %v500, %v528
    %v567 = vmul.f32 %v501, %v528
    %v568 = vmul.f32 %v502, %v528
    %v569 = vmul.f32 %v503, %v528
    %v570 = vmul.f32 %v504, %v528
    %v571 = vmul.f32 %v505, %v528
    %v572 = vmul.f32 %v506, %v528
    %v573 = vmul.f32 %v507, %v528
    %v574 = vmul.f32 %v508, %v528
    %v575 = vmul.f32 %v509, %v528
    %v576 = vmul.f32 %v510, %v528
    %v577 = vmul.f32 %v511, %v528
    %v578 = vmul.f32 %v512, %v528
    %v579 = vmul.f32 %v513, %v528
    %v580 = vmul.f32 %v514, %v528
    %v581 = vmul.f32 %v515, %v528
    %v582 = vmul.f32 %v516, %v528
    %v583 = vmul.f32 %v517, %v528
    %v584 = vmul.f32 %v518, %v528
    %v585 = vmul.f32 %v519, %v528
    %v586 = vmul.f32 %v520, %v528
    %v587 = vmul.f32 %v521, %v528
    %v588 = vmul.f32 %v522, %v528
    %v589 = vmul.f32 %v523, %v528
    %v590 = vmul.f32 %v524, %v528
    %v591 = vmul.f32 %v525, %v528
    %v592 = vmul.f32 %v526, %v528
    %s593 = sld [smem:[#allocation9 + $0x1]]
    %v594 = vstv %s593
    %v595 = vadd.f32 %v529, %v594
    %v596 = vadd.f32 %v530, %v594
    %v597 = vadd.f32 %v531, %v594
    %v598 = vadd.f32 %v532, %v594
    %v599 = vadd.f32 %v533, %v594
    %v600 = vadd.f32 %v534, %v594
    %v601 = vadd.f32 %v535, %v594
    %v602 = vadd.f32 %v536, %v594
    %v603 = vadd.f32 %v537, %v594
    %v604 = vadd.f32 %v538, %v594
    %v605 = vadd.f32 %v539, %v594
    %v606 = vadd.f32 %v540, %v594
    %v607 = vadd.f32 %v541, %v594
    %v608 = vadd.f32 %v542, %v594
    %v609 = vadd.f32 %v543, %v594
    %v610 = vadd.f32 %v544, %v594
    %v611 = vadd.f32 %v545, %v594
    %v612 = vadd.f32 %v546, %v594
    %v613 = vadd.f32 %v547, %v594
    %v614 = vadd.f32 %v548, %v594
    %v615 = vadd.f32 %v549, %v594
    %v616 = vadd.f32 %v550, %v594
    %v617 = vadd.f32 %v551, %v594
    %v618 = vadd.f32 %v552, %v594
    %v619 = vadd.f32 %v553, %v594
    %v620 = vadd.f32 %v554, %v594
    %v621 = vadd.f32 %v555, %v594
    %v622 = vadd.f32 %v556, %v594
    %v623 = vadd.f32 %v557, %v594
    %v624 = vadd.f32 %v558, %v594
    %v625 = vadd.f32 %v559, %v594
    %v626 = vadd.f32 %v560, %v594
    %v627 = vadd.f32 %v561, %v594
    %v628 = vadd.f32 %v562, %v594
    %v629 = vadd.f32 %v563, %v594
    %v630 = vadd.f32 %v564, %v594
    %v631 = vadd.f32 %v565, %v594
    %v632 = vadd.f32 %v566, %v594
    %v633 = vadd.f32 %v567, %v594
    %v634 = vadd.f32 %v568, %v594
    %v635 = vadd.f32 %v569, %v594
    %v636 = vadd.f32 %v570, %v594
    %v637 = vadd.f32 %v571, %v594
    %v638 = vadd.f32 %v572, %v594
    %v639 = vadd.f32 %v573, %v594
    %v640 = vadd.f32 %v574, %v594
    %v641 = vadd.f32 %v575, %v594
    %v642 = vadd.f32 %v576, %v594
    %v643 = vadd.f32 %v577, %v594
    %v644 = vadd.f32 %v578, %v594
    %v645 = vadd.f32 %v579, %v594
    %v646 = vadd.f32 %v580, %v594
    %v647 = vadd.f32 %v581, %v594
    %v648 = vadd.f32 %v582, %v594
    %v649 = vadd.f32 %v583, %v594
    %v650 = vadd.f32 %v584, %v594
    %v651 = vadd.f32 %v585, %v594
    %v652 = vadd.f32 %v586, %v594
    %v653 = vadd.f32 %v587, %v594
    %v654 = vadd.f32 %v588, %v594
    %v655 = vadd.f32 %v589, %v594
    %v656 = vadd.f32 %v590, %v594
    %v657 = vadd.f32 %v591, %v594
    %v658 = vadd.f32 %v592, %v594
    %v659 = vmax.f32 %v333, %v595
    %v660 = vmax.f32 %v334, %v596
    %v661 = vmax.f32 %v335, %v597
    %v662 = vmax.f32 %v336, %v598
    %v663 = vmax.f32 %v337, %v599
    %v664 = vmax.f32 %v338, %v600
    %v665 = vmax.f32 %v339, %v601
    %v666 = vmax.f32 %v340, %v602
    %v667 = vmax.f32 %v341, %v603
    %v668 = vmax.f32 %v342, %v604
    %v669 = vmax.f32 %v343, %v605
    %v670 = vmax.f32 %v344, %v606
    %v671 = vmax.f32 %v345, %v607
    %v672 = vmax.f32 %v346, %v608
    %v673 = vmax.f32 %v347, %v609
    %v674 = vmax.f32 %v348, %v610
    %v675 = vmax.f32 %v349, %v611
    %v676 = vmax.f32 %v350, %v612
    %v677 = vmax.f32 %v351, %v613
    %v678 = vmax.f32 %v352, %v614
    %v679 = vmax.f32 %v353, %v615
    %v680 = vmax.f32 %v354, %v616
    %v681 = vmax.f32 %v355, %v617
    %v682 = vmax.f32 %v356, %v618
    %v683 = vmax.f32 %v357, %v619
    %v684 = vmax.f32 %v358, %v620
    %v685 = vmax.f32 %v359, %v621
    %v686 = vmax.f32 %v360, %v622
    %v687 = vmax.f32 %v361, %v623
    %v688 = vmax.f32 %v362, %v624
    %v689 = vmax.f32 %v363, %v625
    %v690 = vmax.f32 %v364, %v626
    %v691 = vmax.f32 %v365, %v627
    %v692 = vmax.f32 %v366, %v628
    %v693 = vmax.f32 %v367, %v629
    %v694 = vmax.f32 %v368, %v630
    %v695 = vmax.f32 %v369, %v631
    %v696 = vmax.f32 %v370, %v632
    %v697 = vmax.f32 %v371, %v633
    %v698 = vmax.f32 %v372, %v634
    %v699 = vmax.f32 %v373, %v635
    %v700 = vmax.f32 %v374, %v636
    %v701 = vmax.f32 %v375, %v637
    %v702 = vmax.f32 %v376, %v638
    %v703 = vmax.f32 %v377, %v639
    %v704 = vmax.f32 %v378, %v640
    %v705 = vmax.f32 %v379, %v641
    %v706 = vmax.f32 %v380, %v642
    %v707 = vmax.f32 %v381, %v643
    %v708 = vmax.f32 %v382, %v644
    %v709 = vmax.f32 %v383, %v645
    %v710 = vmax.f32 %v384, %v646
    %v711 = vmax.f32 %v385, %v647
    %v712 = vmax.f32 %v386, %v648
    %v713 = vmax.f32 %v387, %v649
    %v714 = vmax.f32 %v388, %v650
    %v715 = vmax.f32 %v389, %v651
    %v716 = vmax.f32 %v390, %v652
    %v717 = vmax.f32 %v391, %v653
    %v718 = vmax.f32 %v392, %v654
    %v719 = vmax.f32 %v393, %v655
    %v720 = vmax.f32 %v394, %v656
    %v721 = vmax.f32 %v395, %v657
    %v722 = vmax.f32 %v396, %v658
    %v723 = vsub.f32 %v333, %v595
    %v724 = vsub.f32 %v334, %v596
    %v725 = vsub.f32 %v335, %v597
    %v726 = vsub.f32 %v336, %v598
    %v727 = vsub.f32 %v337, %v599
    %v728 = vsub.f32 %v338, %v600
    %v729 = vsub.f32 %v339, %v601
    %v730 = vsub.f32 %v340, %v602
    %v731 = vsub.f32 %v341, %v603
    %v732 = vsub.f32 %v342, %v604
    %v733 = vsub.f32 %v343, %v605
    %v734 = vsub.f32 %v344, %v606
    %v735 = vsub.f32 %v345, %v607
    %v736 = vsub.f32 %v346, %v608
    %v737 = vsub.f32 %v347, %v609
    %v738 = vsub.f32 %v348, %v610
    %v739 = vsub.f32 %v349, %v611
    %v740 = vsub.f32 %v350, %v612
    %v741 = vsub.f32 %v351, %v613
    %v742 = vsub.f32 %v352, %v614
    %v743 = vsub.f32 %v353, %v615
    %v744 = vsub.f32 %v354, %v616
    %v745 = vsub.f32 %v355, %v617
    %v746 = vsub.f32 %v356, %v618
    %v747 = vsub.f32 %v357, %v619
    %v748 = vsub.f32 %v358, %v620
    %v749 = vsub.f32 %v359, %v621
    %v750 = vsub.f32 %v360, %v622
    %v751 = vsub.f32 %v361, %v623
    %v752 = vsub.f32 %v362, %v624
    %v753 = vsub.f32 %v363, %v625
    %v754 = vsub.f32 %v364, %v626
    %v755 = vsub.f32 %v365, %v627
    %v756 = vsub.f32 %v366, %v628
    %v757 = vsub.f32 %v367, %v629
    %v758 = vsub.f32 %v368, %v630
    %v759 = vsub.f32 %v369, %v631
    %v760 = vsub.f32 %v370, %v632
    %v761 = vsub.f32 %v371, %v633
    %v762 = vsub.f32 %v372, %v634
    %v763 = vsub.f32 %v373, %v635
    %v764 = vsub.f32 %v374, %v636
    %v765 = vsub.f32 %v375, %v637
    %v766 = vsub.f32 %v376, %v638
    %v767 = vsub.f32 %v377, %v639
    %v768 = vsub.f32 %v378, %v640
    %v769 = vsub.f32 %v379, %v641
    %v770 = vsub.f32 %v380, %v642
    %v771 = vsub.f32 %v381, %v643
    %v772 = vsub.f32 %v382, %v644
    %v773 = vsub.f32 %v383, %v645
    %v774 = vsub.f32 %v384, %v646
    %v775 = vsub.f32 %v385, %v647
    %v776 = vsub.f32 %v386, %v648
    %v777 = vsub.f32 %v387, %v649
    %v778 = vsub.f32 %v388, %v650
    %v779 = vsub.f32 %v389, %v651
    %v780 = vsub.f32 %v390, %v652
    %v781 = vsub.f32 %v391, %v653
    %v782 = vsub.f32 %v392, %v654
    %v783 = vsub.f32 %v393, %v655
    %v784 = vsub.f32 %v394, %v656
    %v785 = vsub.f32 %v395, %v657
    %v786 = vsub.f32 %v396, %v658
    %v787 = vand.u32 2147483647, %v723
    %v788 = vand.u32 2147483647, %v724
    %v789 = vand.u32 2147483647, %v725
    %v790 = vand.u32 2147483647, %v726
    %v791 = vand.u32 2147483647, %v727
    %v792 = vand.u32 2147483647, %v728
    %v793 = vand.u32 2147483647, %v729
    %v794 = vand.u32 2147483647, %v730
    %v795 = vand.u32 2147483647, %v731
    %v796 = vand.u32 2147483647, %v732
    %v797 = vand.u32 2147483647, %v733
    %v798 = vand.u32 2147483647, %v734
    %v799 = vand.u32 2147483647, %v735
    %v800 = vand.u32 2147483647, %v736
    %v801 = vand.u32 2147483647, %v737
    %v802 = vand.u32 2147483647, %v738
    %v803 = vand.u32 2147483647, %v739
    %v804 = vand.u32 2147483647, %v740
    %v805 = vand.u32 2147483647, %v741
    %v806 = vand.u32 2147483647, %v742
    %v807 = vand.u32 2147483647, %v743
    %v808 = vand.u32 2147483647, %v744
    %v809 = vand.u32 2147483647, %v745
    %v810 = vand.u32 2147483647, %v746
    %v811 = vand.u32 2147483647, %v747
    %v812 = vand.u32 2147483647, %v748
    %v813 = vand.u32 2147483647, %v749
    %v814 = vand.u32 2147483647, %v750
    %v815 = vand.u32 2147483647, %v751
    %v816 = vand.u32 2147483647, %v752
    %v817 = vand.u32 2147483647, %v753
    %v818 = vand.u32 2147483647, %v754
    %v819 = vand.u32 2147483647, %v755
    %v820 = vand.u32 2147483647, %v756
    %v821 = vand.u32 2147483647, %v757
    %v822 = vand.u32 2147483647, %v758
    %v823 = vand.u32 2147483647, %v759
    %v824 = vand.u32 2147483647, %v760
    %v825 = vand.u32 2147483647, %v761
    %v826 = vand.u32 2147483647, %v762
    %v827 = vand.u32 2147483647, %v763
    %v828 = vand.u32 2147483647, %v764
    %v829 = vand.u32 2147483647, %v765
    %v830 = vand.u32 2147483647, %v766
    %v831 = vand.u32 2147483647, %v767
    %v832 = vand.u32 2147483647, %v768
    %v833 = vand.u32 2147483647, %v769
    %v834 = vand.u32 2147483647, %v770
    %v835 = vand.u32 2147483647, %v771
    %v836 = vand.u32 2147483647, %v772
    %v837 = vand.u32 2147483647, %v773
    %v838 = vand.u32 2147483647, %v774
    %v839 = vand.u32 2147483647, %v775
    %v840 = vand.u32 2147483647, %v776
    %v841 = vand.u32 2147483647, %v777
    %v842 = vand.u32 2147483647, %v778
    %v843 = vand.u32 2147483647, %v779
    %v844 = vand.u32 2147483647, %v780
    %v845 = vand.u32 2147483647, %v781
    %v846 = vand.u32 2147483647, %v782
    %v847 = vand.u32 2147483647, %v783
    %v848 = vand.u32 2147483647, %v784
    %v849 = vand.u32 2147483647, %v785
    %v850 = vand.u32 2147483647, %v786
    %v851 = vsub.f32 0.0, %v787
    %v852 = vsub.f32 0.0, %v788
    %v853 = vsub.f32 0.0, %v789
    %v854 = vsub.f32 0.0, %v790
    %v855 = vsub.f32 0.0, %v791
    %v856 = vsub.f32 0.0, %v792
    %v857 = vsub.f32 0.0, %v793
    %v858 = vsub.f32 0.0, %v794
    %v859 = vsub.f32 0.0, %v795
    %v860 = vsub.f32 0.0, %v796
    %v861 = vsub.f32 0.0, %v797
    %v862 = vsub.f32 0.0, %v798
    %v863 = vsub.f32 0.0, %v799
    %v864 = vsub.f32 0.0, %v800
    %v865 = vsub.f32 0.0, %v801
    %v866 = vsub.f32 0.0, %v802
    %v867 = vsub.f32 0.0, %v803
    %v868 = vsub.f32 0.0, %v804
    %v869 = vsub.f32 0.0, %v805
    %v870 = vsub.f32 0.0, %v806
    %v871 = vsub.f32 0.0, %v807
    %v872 = vsub.f32 0.0, %v808
    %v873 = vsub.f32 0.0, %v809
    %v874 = vsub.f32 0.0, %v810
    %v875 = vsub.f32 0.0, %v811
    %v876 = vsub.f32 0.0, %v812
    %v877 = vsub.f32 0.0, %v813
    %v878 = vsub.f32 0.0, %v814
    %v879 = vsub.f32 0.0, %v815
    %v880 = vsub.f32 0.0, %v816
    %v881 = vsub.f32 0.0, %v817
    %v882 = vsub.f32 0.0, %v818
    %v883 = vsub.f32 0.0, %v819
    %v884 = vsub.f32 0.0, %v820
    %v885 = vsub.f32 0.0, %v821
    %v886 = vsub.f32 0.0, %v822
    %v887 = vsub.f32 0.0, %v823
    %v888 = vsub.f32 0.0, %v824
    %v889 = vsub.f32 0.0, %v825
    %v890 = vsub.f32 0.0, %v826
    %v891 = vsub.f32 0.0, %v827
    %v892 = vsub.f32 0.0, %v828
    %v893 = vsub.f32 0.0, %v829
    %v894 = vsub.f32 0.0, %v830
    %v895 = vsub.f32 0.0, %v831
    %v896 = vsub.f32 0.0, %v832
    %v897 = vsub.f32 0.0, %v833
    %v898 = vsub.f32 0.0, %v834
    %v899 = vsub.f32 0.0, %v835
    %v900 = vsub.f32 0.0, %v836
    %v901 = vsub.f32 0.0, %v837
    %v902 = vsub.f32 0.0, %v838
    %v903 = vsub.f32 0.0, %v839
    %v904 = vsub.f32 0.0, %v840
    %v905 = vsub.f32 0.0, %v841
    %v906 = vsub.f32 0.0, %v842
    %v907 = vsub.f32 0.0, %v843
    %v908 = vsub.f32 0.0, %v844
    %v909 = vsub.f32 0.0, %v845
    %v910 = vsub.f32 0.0, %v846
    %v911 = vsub.f32 0.0, %v847
    %v912 = vsub.f32 0.0, %v848
    %v913 = vsub.f32 0.0, %v849
    %v914 = vsub.f32 0.0, %v850
    %v915 = vmul.f32 %v851, 1.442695
    %v916 = vpow.pop %v915
    %v917 = vmul.f32 %v852, 1.442695
    %v918 = vpow.pop %v917
    %v919 = vmul.f32 %v853, 1.442695
    %v920 = vpow.pop %v919
    %v921 = vmul.f32 %v854, 1.442695
    %v922 = vpow.pop %v921
    %v923 = vmul.f32 %v855, 1.442695
    %v924 = vpow.pop %v923
    %v925 = vmul.f32 %v856, 1.442695
    %v926 = vpow.pop %v925
    %v927 = vmul.f32 %v857, 1.442695
    %v928 = vpow.pop %v927
    %v929 = vmul.f32 %v858, 1.442695
    %v930 = vpow.pop %v929
    %v931 = vmul.f32 %v859, 1.442695
    %v932 = vpow.pop %v931
    %v933 = vmul.f32 %v860, 1.442695
    %v934 = vpow.pop %v933
    %v935 = vmul.f32 %v861, 1.442695
    %v936 = vpow.pop %v935
    %v937 = vmul.f32 %v862, 1.442695
    %v938 = vpow.pop %v937
    %v939 = vmul.f32 %v863, 1.442695
    %v940 = vpow.pop %v939
    %v941 = vmul.f32 %v864, 1.442695
    %v942 = vpow.pop %v941
    %v943 = vmul.f32 %v865, 1.442695
    %v944 = vpow.pop %v943
    %v945 = vmul.f32 %v866, 1.442695
    %v946 = vpow.pop %v945
    %v947 = vmul.f32 %v867, 1.442695
    %v948 = vpow.pop %v947
    %v949 = vmul.f32 %v868, 1.442695
    %v950 = vpow.pop %v949
    %v951 = vmul.f32 %v869, 1.442695
    %v952 = vpow.pop %v951
    %v953 = vmul.f32 %v870, 1.442695
    %v954 = vpow.pop %v953
    %v955 = vmul.f32 %v871, 1.442695
    %v956 = vpow.pop %v955
    %v957 = vmul.f32 %v872, 1.442695
    %v958 = vpow.pop %v957
    %v959 = vmul.f32 %v873, 1.442695
    %v960 = vpow.pop %v959
    %v961 = vmul.f32 %v874, 1.442695
    %v962 = vpow.pop %v961
    %v963 = vmul.f32 %v875, 1.442695
    %v964 = vpow.pop %v963
    %v965 = vmul.f32 %v876, 1.442695
    %v966 = vpow.pop %v965
    %v967 = vmul.f32 %v877, 1.442695
    %v968 = vpow.pop %v967
    %v969 = vmul.f32 %v878, 1.442695
    %v970 = vpow.pop %v969
    %v971 = vmul.f32 %v879, 1.442695
    %v972 = vpow.pop %v971
    %v973 = vmul.f32 %v880, 1.442695
    %v974 = vpow.pop %v973
    %v975 = vmul.f32 %v881, 1.442695
    %v976 = vpow.pop %v975
    %v977 = vmul.f32 %v882, 1.442695
    %v978 = vpow.pop %v977
    %v979 = vmul.f32 %v883, 1.442695
    %v980 = vpow.pop %v979
    %v981 = vmul.f32 %v884, 1.442695
    %v982 = vpow.pop %v981
    %v983 = vmul.f32 %v885, 1.442695
    %v984 = vpow.pop %v983
    %v985 = vmul.f32 %v886, 1.442695
    %v986 = vpow.pop %v985
    %v987 = vmul.f32 %v887, 1.442695
    %v988 = vpow.pop %v987
    %v989 = vmul.f32 %v888, 1.442695
    %v990 = vpow.pop %v989
    %v991 = vmul.f32 %v889, 1.442695
    %v992 = vpow.pop %v991
    %v993 = vmul.f32 %v890, 1.442695
    %v994 = vpow.pop %v993
    %v995 = vmul.f32 %v891, 1.442695
    %v996 = vpow.pop %v995
    %v997 = vmul.f32 %v892, 1.442695
    %v998 = vpow.pop %v997
    %v999 = vmul.f32 %v893, 1.442695
    %v1000 = vpow.pop %v999
    %v1001 = vmul.f32 %v894, 1.442695
    %v1002 = vpow.pop %v1001
    %v1003 = vmul.f32 %v895, 1.442695
    %v1004 = vpow.pop %v1003
    %v1005 = vmul.f32 %v896, 1.442695
    %v1006 = vpow.pop %v1005
    %v1007 = vmul.f32 %v897, 1.442695
    %v1008 = vpow.pop %v1007
    %v1009 = vmul.f32 %v898, 1.442695
    %v1010 = vpow.pop %v1009
    %v1011 = vmul.f32 %v899, 1.442695
    %v1012 = vpow.pop %v1011
    %v1013 = vmul.f32 %v900, 1.442695
    %v1014 = vpow.pop %v1013
    %v1015 = vmul.f32 %v901, 1.442695
    %v1016 = vpow.pop %v1015
    %v1017 = vmul.f32 %v902, 1.442695
    %v1018 = vpow.pop %v1017
    %v1019 = vmul.f32 %v903, 1.442695
    %v1020 = vpow.pop %v1019
    %v1021 = vmul.f32 %v904, 1.442695
    %v1022 = vpow.pop %v1021
    %v1023 = vmul.f32 %v905, 1.442695
    %v1024 = vpow.pop %v1023
    %v1025 = vmul.f32 %v906, 1.442695
    %v1026 = vpow.pop %v1025
    %v1027 = vmul.f32 %v907, 1.442695
    %v1028 = vpow.pop %v1027
    %v1029 = vmul.f32 %v908, 1.442695
    %v1030 = vpow.pop %v1029
    %v1031 = vmul.f32 %v909, 1.442695
    %v1032 = vpow.pop %v1031
    %v1033 = vmul.f32 %v910, 1.442695
    %v1034 = vpow.pop %v1033
    %v1035 = vmul.f32 %v911, 1.442695
    %v1036 = vpow.pop %v1035
    %v1037 = vmul.f32 %v912, 1.442695
    %v1038 = vpow.pop %v1037
    %v1039 = vmul.f32 %v913, 1.442695
    %v1040 = vpow.pop %v1039
    %v1041 = vmul.f32 %v914, 1.442695
    %v1042 = vpow.pop %v1041
    %v1043 = vadd.f32 %v916, 1.0
    %v1044 = vadd.f32 %v918, 1.0
    %v1045 = vadd.f32 %v920, 1.0
    %v1046 = vadd.f32 %v922, 1.0
    %v1047 = vadd.f32 %v924, 1.0
    %v1048 = vadd.f32 %v926, 1.0
    %v1049 = vadd.f32 %v928, 1.0
    %v1050 = vadd.f32 %v930, 1.0
    %v1051 = vadd.f32 %v932, 1.0
    %v1052 = vadd.f32 %v934, 1.0
    %v1053 = vadd.f32 %v936, 1.0
    %v1054 = vadd.f32 %v938, 1.0
    %v1055 = vadd.f32 %v940, 1.0
    %v1056 = vadd.f32 %v942, 1.0
    %v1057 = vadd.f32 %v944, 1.0
    %v1058 = vadd.f32 %v946, 1.0
    %v1059 = vadd.f32 %v948, 1.0
    %v1060 = vadd.f32 %v950, 1.0
    %v1061 = vadd.f32 %v952, 1.0
    %v1062 = vadd.f32 %v954, 1.0
    %v1063 = vadd.f32 %v956, 1.0
    %v1064 = vadd.f32 %v958, 1.0
    %v1065 = vadd.f32 %v960, 1.0
    %v1066 = vadd.f32 %v962, 1.0
    %v1067 = vadd.f32 %v964, 1.0
    %v1068 = vadd.f32 %v966, 1.0
    %v1069 = vadd.f32 %v968, 1.0
    %v1070 = vadd.f32 %v970, 1.0
    %v1071 = vadd.f32 %v972, 1.0
    %v1072 = vadd.f32 %v974, 1.0
    %v1073 = vadd.f32 %v976, 1.0
    %v1074 = vadd.f32 %v978, 1.0
    %v1075 = vadd.f32 %v980, 1.0
    %v1076 = vadd.f32 %v982, 1.0
    %v1077 = vadd.f32 %v984, 1.0
    %v1078 = vadd.f32 %v986, 1.0
    %v1079 = vadd.f32 %v988, 1.0
    %v1080 = vadd.f32 %v990, 1.0
    %v1081 = vadd.f32 %v992, 1.0
    %v1082 = vadd.f32 %v994, 1.0
    %v1083 = vadd.f32 %v996, 1.0
    %v1084 = vadd.f32 %v998, 1.0
    %v1085 = vadd.f32 %v1000, 1.0
    %v1086 = vadd.f32 %v1002, 1.0
    %v1087 = vadd.f32 %v1004, 1.0
    %v1088 = vadd.f32 %v1006, 1.0
    %v1089 = vadd.f32 %v1008, 1.0
    %v1090 = vadd.f32 %v1010, 1.0
    %v1091 = vadd.f32 %v1012, 1.0
    %v1092 = vadd.f32 %v1014, 1.0
    %v1093 = vadd.f32 %v1016, 1.0
    %v1094 = vadd.f32 %v1018, 1.0
    %v1095 = vadd.f32 %v1020, 1.0
    %v1096 = vadd.f32 %v1022, 1.0
    %v1097 = vadd.f32 %v1024, 1.0
    %v1098 = vadd.f32 %v1026, 1.0
    %v1099 = vadd.f32 %v1028, 1.0
    %v1100 = vadd.f32 %v1030, 1.0
    %v1101 = vadd.f32 %v1032, 1.0
    %v1102 = vadd.f32 %v1034, 1.0
    %v1103 = vadd.f32 %v1036, 1.0
    %v1104 = vadd.f32 %v1038, 1.0
    %v1105 = vadd.f32 %v1040, 1.0
    %v1106 = vadd.f32 %v1042, 1.0
    %v1107 = vlog2.pop %v1043
    %v1108 = vmul.f32 %v1107, 0.6931472
    %v1109 = vlog2.pop %v1044
    %v1110 = vmul.f32 %v1109, 0.6931472
    %v1111 = vlog2.pop %v1045
    %v1112 = vmul.f32 %v1111, 0.6931472
    %v1113 = vlog2.pop %v1046
    %v1114 = vmul.f32 %v1113, 0.6931472
    %v1115 = vlog2.pop %v1047
    %v1116 = vmul.f32 %v1115, 0.6931472
    %v1117 = vlog2.pop %v1048
    %v1118 = vmul.f32 %v1117, 0.6931472
    %v1119 = vlog2.pop %v1049
    %v1120 = vmul.f32 %v1119, 0.6931472
    %v1121 = vlog2.pop %v1050
    %v1122 = vmul.f32 %v1121, 0.6931472
    %v1123 = vlog2.pop %v1051
    %v1124 = vmul.f32 %v1123, 0.6931472
    %v1125 = vlog2.pop %v1052
    %v1126 = vmul.f32 %v1125, 0.6931472
    %v1127 = vlog2.pop %v1053
    %v1128 = vmul.f32 %v1127, 0.6931472
    %v1129 = vlog2.pop %v1054
    %v1130 = vmul.f32 %v1129, 0.6931472
    %v1131 = vlog2.pop %v1055
    %v1132 = vmul.f32 %v1131, 0.6931472
    %v1133 = vlog2.pop %v1056
    %v1134 = vmul.f32 %v1133, 0.6931472
    %v1135 = vlog2.pop %v1057
    %v1136 = vmul.f32 %v1135, 0.6931472
    %v1137 = vlog2.pop %v1058
    %v1138 = vmul.f32 %v1137, 0.6931472
    %v1139 = vlog2.pop %v1059
    %v1140 = vmul.f32 %v1139, 0.6931472
    %v1141 = vlog2.pop %v1060
    %v1142 = vmul.f32 %v1141, 0.6931472
    %v1143 = vlog2.pop %v1061
    %v1144 = vmul.f32 %v1143, 0.6931472
    %v1145 = vlog2.pop %v1062
    %v1146 = vmul.f32 %v1145, 0.6931472
    %v1147 = vlog2.pop %v1063
    %v1148 = vmul.f32 %v1147, 0.6931472
    %v1149 = vlog2.pop %v1064
    %v1150 = vmul.f32 %v1149, 0.6931472
    %v1151 = vlog2.pop %v1065
    %v1152 = vmul.f32 %v1151, 0.6931472
    %v1153 = vlog2.pop %v1066
    %v1154 = vmul.f32 %v1153, 0.6931472
    %v1155 = vlog2.pop %v1067
    %v1156 = vmul.f32 %v1155, 0.6931472
    %v1157 = vlog2.pop %v1068
    %v1158 = vmul.f32 %v1157, 0.6931472
    %v1159 = vlog2.pop %v1069
    %v1160 = vmul.f32 %v1159, 0.6931472
    %v1161 = vlog2.pop %v1070
    %v1162 = vmul.f32 %v1161, 0.6931472
    %v1163 = vlog2.pop %v1071
    %v1164 = vmul.f32 %v1163, 0.6931472
    %v1165 = vlog2.pop %v1072
    %v1166 = vmul.f32 %v1165, 0.6931472
    %v1167 = vlog2.pop %v1073
    %v1168 = vmul.f32 %v1167, 0.6931472
    %v1169 = vlog2.pop %v1074
    %v1170 = vmul.f32 %v1169, 0.6931472
    %v1171 = vlog2.pop %v1075
    %v1172 = vmul.f32 %v1171, 0.6931472
    %v1173 = vlog2.pop %v1076
    %v1174 = vmul.f32 %v1173, 0.6931472
    %v1175 = vlog2.pop %v1077
    %v1176 = vmul.f32 %v1175, 0.6931472
    %v1177 = vlog2.pop %v1078
    %v1178 = vmul.f32 %v1177, 0.6931472
    %v1179 = vlog2.pop %v1079
    %v1180 = vmul.f32 %v1179, 0.6931472
    %v1181 = vlog2.pop %v1080
    %v1182 = vmul.f32 %v1181, 0.6931472
    %v1183 = vlog2.pop %v1081
    %v1184 = vmul.f32 %v1183, 0.6931472
    %v1185 = vlog2.pop %v1082
    %v1186 = vmul.f32 %v1185, 0.6931472
    %v1187 = vlog2.pop %v1083
    %v1188 = vmul.f32 %v1187, 0.6931472
    %v1189 = vlog2.pop %v1084
    %v1190 = vmul.f32 %v1189, 0.6931472
    %v1191 = vlog2.pop %v1085
    %v1192 = vmul.f32 %v1191, 0.6931472
    %v1193 = vlog2.pop %v1086
    %v1194 = vmul.f32 %v1193, 0.6931472
    %v1195 = vlog2.pop %v1087
    %v1196 = vmul.f32 %v1195, 0.6931472
    %v1197 = vlog2.pop %v1088
    %v1198 = vmul.f32 %v1197, 0.6931472
    %v1199 = vlog2.pop %v1089
    %v1200 = vmul.f32 %v1199, 0.6931472
    %v1201 = vlog2.pop %v1090
    %v1202 = vmul.f32 %v1201, 0.6931472
    %v1203 = vlog2.pop %v1091
    %v1204 = vmul.f32 %v1203, 0.6931472
    %v1205 = vlog2.pop %v1092
    %v1206 = vmul.f32 %v1205, 0.6931472
    %v1207 = vlog2.pop %v1093
    %v1208 = vmul.f32 %v1207, 0.6931472
    %v1209 = vlog2.pop %v1094
    %v1210 = vmul.f32 %v1209, 0.6931472
    %v1211 = vlog2.pop %v1095
    %v1212 = vmul.f32 %v1211, 0.6931472
    %v1213 = vlog2.pop %v1096
    %v1214 = vmul.f32 %v1213, 0.6931472
    %v1215 = vlog2.pop %v1097
    %v1216 = vmul.f32 %v1215, 0.6931472
    %v1217 = vlog2.pop %v1098
    %v1218 = vmul.f32 %v1217, 0.6931472
    %v1219 = vlog2.pop %v1099
    %v1220 = vmul.f32 %v1219, 0.6931472
    %v1221 = vlog2.pop %v1100
    %v1222 = vmul.f32 %v1221, 0.6931472
    %v1223 = vlog2.pop %v1101
    %v1224 = vmul.f32 %v1223, 0.6931472
    %v1225 = vlog2.pop %v1102
    %v1226 = vmul.f32 %v1225, 0.6931472
    %v1227 = vlog2.pop %v1103
    %v1228 = vmul.f32 %v1227, 0.6931472
    %v1229 = vlog2.pop %v1104
    %v1230 = vmul.f32 %v1229, 0.6931472
    %v1231 = vlog2.pop %v1105
    %v1232 = vmul.f32 %v1231, 0.6931472
    %v1233 = vlog2.pop %v1106
    %v1234 = vmul.f32 %v1233, 0.6931472
    %v1235 = vadd.f32 %v659, %v1108
    %v1236 = vadd.f32 %v660, %v1110
    %v1237 = vadd.f32 %v661, %v1112
    %v1238 = vadd.f32 %v662, %v1114
    %v1239 = vadd.f32 %v663, %v1116
    %v1240 = vadd.f32 %v664, %v1118
    %v1241 = vadd.f32 %v665, %v1120
    %v1242 = vadd.f32 %v666, %v1122
    %v1243 = vadd.f32 %v667, %v1124
    %v1244 = vadd.f32 %v668, %v1126
    %v1245 = vadd.f32 %v669, %v1128
    %v1246 = vadd.f32 %v670, %v1130
    %v1247 = vadd.f32 %v671, %v1132
    %v1248 = vadd.f32 %v672, %v1134
    %v1249 = vadd.f32 %v673, %v1136
    %v1250 = vadd.f32 %v674, %v1138
    %v1251 = vadd.f32 %v675, %v1140
    %v1252 = vadd.f32 %v676, %v1142
    %v1253 = vadd.f32 %v677, %v1144
    %v1254 = vadd.f32 %v678, %v1146
    %v1255 = vadd.f32 %v679, %v1148
    %v1256 = vadd.f32 %v680, %v1150
    %v1257 = vadd.f32 %v681, %v1152
    %v1258 = vadd.f32 %v682, %v1154
    %v1259 = vadd.f32 %v683, %v1156
    %v1260 = vadd.f32 %v684, %v1158
    %v1261 = vadd.f32 %v685, %v1160
    %v1262 = vadd.f32 %v686, %v1162
    %v1263 = vadd.f32 %v687, %v1164
    %v1264 = vadd.f32 %v688, %v1166
    %v1265 = vadd.f32 %v689, %v1168
    %v1266 = vadd.f32 %v690, %v1170
    %v1267 = vadd.f32 %v691, %v1172
    %v1268 = vadd.f32 %v692, %v1174
    %v1269 = vadd.f32 %v693, %v1176
    %v1270 = vadd.f32 %v694, %v1178
    %v1271 = vadd.f32 %v695, %v1180
    %v1272 = vadd.f32 %v696, %v1182
    %v1273 = vadd.f32 %v697, %v1184
    %v1274 = vadd.f32 %v698, %v1186
    %v1275 = vadd.f32 %v699, %v1188
    %v1276 = vadd.f32 %v700, %v1190
    %v1277 = vadd.f32 %v701, %v1192
    %v1278 = vadd.f32 %v702, %v1194
    %v1279 = vadd.f32 %v703, %v1196
    %v1280 = vadd.f32 %v704, %v1198
    %v1281 = vadd.f32 %v705, %v1200
    %v1282 = vadd.f32 %v706, %v1202
    %v1283 = vadd.f32 %v707, %v1204
    %v1284 = vadd.f32 %v708, %v1206
    %v1285 = vadd.f32 %v709, %v1208
    %v1286 = vadd.f32 %v710, %v1210
    %v1287 = vadd.f32 %v711, %v1212
    %v1288 = vadd.f32 %v712, %v1214
    %v1289 = vadd.f32 %v713, %v1216
    %v1290 = vadd.f32 %v714, %v1218
    %v1291 = vadd.f32 %v715, %v1220
    %v1292 = vadd.f32 %v716, %v1222
    %v1293 = vadd.f32 %v717, %v1224
    %v1294 = vadd.f32 %v718, %v1226
    %v1295 = vadd.f32 %v719, %v1228
    %v1296 = vadd.f32 %v720, %v1230
    %v1297 = vadd.f32 %v721, %v1232
    %v1298 = vadd.f32 %v722, %v1234
    %1299 = vst [vmem:[#allocation11] sm:$0xff] %v1235
    %1300 = vst [vmem:[#allocation11 + $0x8] sm:$0xff] %v1236
    %1301 = vst [vmem:[#allocation11 + $0x10] sm:$0xff] %v1237
    %1302 = vst [vmem:[#allocation11 + $0x18] sm:$0xff] %v1238
    %1303 = vst [vmem:[#allocation11 + $0x20] sm:$0xff] %v1239
    %1304 = vst [vmem:[#allocation11 + $0x28] sm:$0xff] %v1240
    %1305 = vst [vmem:[#allocation11 + $0x30] sm:$0xff] %v1241
    %1306 = vst [vmem:[#allocation11 + $0x38] sm:$0xff] %v1242
    %1307 = vst [vmem:[#allocation11 + $0x40] sm:$0xff] %v1243
    %1308 = vst [vmem:[#allocation11 + $0x48] sm:$0xff] %v1244
    %1309 = vst [vmem:[#allocation11 + $0x50] sm:$0xff] %v1245
    %1310 = vst [vmem:[#allocation11 + $0x58] sm:$0xff] %v1246
    %1311 = vst [vmem:[#allocation11 + $0x60] sm:$0xff] %v1247
    %1312 = vst [vmem:[#allocation11 + $0x68] sm:$0xff] %v1248
    %1313 = vst [vmem:[#allocation11 + $0x70] sm:$0xff] %v1249
    %1314 = vst [vmem:[#allocation11 + $0x78] sm:$0xff] %v1250
    %1315 = vst [vmem:[#allocation11 + $0x80] sm:$0xff] %v1251
    %1316 = vst [vmem:[#allocation11 + $0x88] sm:$0xff] %v1252
    %1317 = vst [vmem:[#allocation11 + $0x90] sm:$0xff] %v1253
    %1318 = vst [vmem:[#allocation11 + $0x98] sm:$0xff] %v1254
    %1319 = vst [vmem:[#allocation11 + $0xa0] sm:$0xff] %v1255
    %1320 = vst [vmem:[#allocation11 + $0xa8] sm:$0xff] %v1256
    %1321 = vst [vmem:[#allocation11 + $0xb0] sm:$0xff] %v1257
    %1322 = vst [vmem:[#allocation11 + $0xb8] sm:$0xff] %v1258
    %1323 = vst [vmem:[#allocation11 + $0xc0] sm:$0xff] %v1259
    %1324 = vst [vmem:[#allocation11 + $0xc8] sm:$0xff] %v1260
    %1325 = vst [vmem:[#allocation11 + $0xd0] sm:$0xff] %v1261
    %1326 = vst [vmem:[#allocation11 + $0xd8] sm:$0xff] %v1262
    %1327 = vst [vmem:[#allocation11 + $0xe0] sm:$0xff] %v1263
    %1328 = vst [vmem:[#allocation11 + $0xe8] sm:$0xff] %v1264
    %1329 = vst [vmem:[#allocation11 + $0xf0] sm:$0xff] %v1265
    %1330 = vst [vmem:[#allocation11 + $0xf8] sm:$0xff] %v1266
    %1331 = vst [vmem:[#allocation11 + $0x100] sm:$0xff] %v1267
    %1332 = vst [vmem:[#allocation11 + $0x108] sm:$0xff] %v1268
    %1333 = vst [vmem:[#allocation11 + $0x110] sm:$0xff] %v1269
    %1334 = vst [vmem:[#allocation11 + $0x118] sm:$0xff] %v1270
    %1335 = vst [vmem:[#allocation11 + $0x120] sm:$0xff] %v1271
    %1336 = vst [vmem:[#allocation11 + $0x128] sm:$0xff] %v1272
    %1337 = vst [vmem:[#allocation11 + $0x130] sm:$0xff] %v1273
    %1338 = vst [vmem:[#allocation11 + $0x138] sm:$0xff] %v1274
    %1339 = vst [vmem:[#allocation11 + $0x140] sm:$0xff] %v1275
    %1340 = vst [vmem:[#allocation11 + $0x148] sm:$0xff] %v1276
    %1341 = vst [vmem:[#allocation11 + $0x150] sm:$0xff] %v1277
    %1342 = vst [vmem:[#allocation11 + $0x158] sm:$0xff] %v1278
    %1343 = vst [vmem:[#allocation11 + $0x160] sm:$0xff] %v1279
    %1344 = vst [vmem:[#allocation11 + $0x168] sm:$0xff] %v1280
    %1345 = vst [vmem:[#allocation11 + $0x170] sm:$0xff] %v1281
    %1346 = vst [vmem:[#allocation11 + $0x178] sm:$0xff] %v1282
    %1347 = vst [vmem:[#allocation11 + $0x180] sm:$0xff] %v1283
    %1348 = vst [vmem:[#allocation11 + $0x188] sm:$0xff] %v1284
    %1349 = vst [vmem:[#allocation11 + $0x190] sm:$0xff] %v1285
    %1350 = vst [vmem:[#allocation11 + $0x198] sm:$0xff] %v1286
    %1351 = vst [vmem:[#allocation11 + $0x1a0] sm:$0xff] %v1287
    %1352 = vst [vmem:[#allocation11 + $0x1a8] sm:$0xff] %v1288
    %1353 = vst [vmem:[#allocation11 + $0x1b0] sm:$0xff] %v1289
    %1354 = vst [vmem:[#allocation11 + $0x1b8] sm:$0xff] %v1290
    %1355 = vst [vmem:[#allocation11 + $0x1c0] sm:$0xff] %v1291
    %1356 = vst [vmem:[#allocation11 + $0x1c8] sm:$0xff] %v1292
    %1357 = vst [vmem:[#allocation11 + $0x1d0] sm:$0xff] %v1293
    %1358 = vst [vmem:[#allocation11 + $0x1d8] sm:$0xff] %v1294
    %1359 = vst [vmem:[#allocation11 + $0x1e0] sm:$0xff] %v1295
    %1360 = vst [vmem:[#allocation11 + $0x1e8] sm:$0xff] %v1296
    %1361 = vst [vmem:[#allocation11 + $0x1f0] sm:$0xff] %v1297
    %1362 = vst [vmem:[#allocation11 + $0x1f8] sm:$0xff] %v1298
    // Predicated region
    $region34: #{tpu_custom_call.1} parent=1 // pred_check
      _
    $region35: #{tpu_custom_call.1} parent=1 // pred_check_branch
      %1364 = sbr.rel (0) target = $region37
    $region36: #{tpu_custom_call.1} parent=1 // pred_region
      %1366 = vsyncadd [#allocation4], 0
      %s1367 = sshll.u32 [#allocation11], 4
      %s1368 = int_to_ptr.vmem [resolvable:$true] %s1367
      %s1369 = sshll.u32 %s4, 4
      %s1370 = int_to_ptr.hbm [resolvable:$true] %s1369
      %1375 = dma.vmem_to_hbm [thread:$0]  %s1368, 8192, %s1370, [#allocation4], 128, 128, 8
    $region37: #{tpu_custom_call.1} parent=1 // pred_fallthru
      _
    // Predicated region
    $region38: #{tpu_custom_call.1} parent=1 // pred_check
      _
    $region39: #{tpu_custom_call.1} parent=1 // pred_check_branch
      %1377 = sbr.rel (0) target = $region41
    $region40: #{tpu_custom_call.1} parent=1 // pred_region
      %1379 = dma.done [#allocation4], 8192
    $region41: #{tpu_custom_call.1} parent=1 // pred_fallthru
      _
    %1380 = vsyncpa [#allocation3], 1
    %1381 = vsyncpa [#allocation4], 1
    %1382 = vsyncpa [#allocation5], 1
    %1383 = vsyncpa [#allocation8], 1
    %1384 = vsyncpa [#allocation6], 1

</llo_original>
